<compile_context>
chip_gen: v5e
topology: v5e:2x2
jax: 0.10.0
libtpu: 0.0.40
codegen_flags: <defaults>
</compile_context>

<pallas_src>
import jax
import jax.numpy as jnp
from jax import lax
from jax.experimental import pallas as pl
from jax.experimental.pallas import tpu as pltpu


# ---------------------------------------------------------------------------
# Parameter packing: ONE contiguous bf16 slab, 8-row-aligned blocks, 128-lane
# wide (w3/b3 columns >= action_dim are zero).
# ---------------------------------------------------------------------------
def _round_up(n, m):
    return (n + m - 1) // m * m


def pack_params(params, obs_dim, rew_dim, hidden, action_dim):
    """Pack (w1,b1,w2,b2,w3,b3) into a single (R, C) bf16 slab.

    Row layout (each block start aligned to a multiple of 8 sublanes):
      w1_obs (obs_dim,H) | w1_rew (rew_dim,H) | b1 (1,H)
      w2 (H,H) | b2 (1,H) | w3 (H,A_pad) | b3 (1,A_pad)
    """
    w1, b1, w2, b2, w3, b3 = params
    a_pad = _round_up(action_dim, 128)
    C = max(_round_up(hidden, 128), a_pad)

    offs = {}
    rows = 0

    def alloc(name, n):
        nonlocal rows
        start = _round_up(rows, 8)
        offs[name] = start
        rows = start + n

    alloc("w1o", obs_dim)
    alloc("w1r", rew_dim)
    alloc("b1", 1)
    alloc("w2", hidden)
    alloc("b2", 1)
    alloc("w3", hidden)
    alloc("b3", 1)
    R = _round_up(rows, 8)

    slab = jnp.zeros((R, C), jnp.float32)
    slab = slab.at[offs["w1o"]:offs["w1o"] + obs_dim, :hidden].set(w1[:obs_dim])
    slab = slab.at[offs["w1r"]:offs["w1r"] + rew_dim, :hidden].set(w1[obs_dim:])
    slab = slab.at[offs["b1"], :hidden].set(b1)
    slab = slab.at[offs["w2"]:offs["w2"] + hidden, :hidden].set(w2)
    slab = slab.at[offs["b2"], :hidden].set(b2)
    slab = slab.at[offs["w3"]:offs["w3"] + hidden, :action_dim].set(w3)
    slab = slab.at[offs["b3"], :action_dim].set(b3)
    return slab.astype(jnp.bfloat16), offs, a_pad


# ---------------------------------------------------------------------------
# Kernel: per-tile MLP + sigmoid, lane-dense (tile_m, 128) store of x_exp.
# Normalization (global sum) is applied outside the kernel.
# ---------------------------------------------------------------------------
def _make_kernel(offs, obs_dim, rew_dim, hidden, action_dim):
    o_w1o, o_w1r, o_b1 = offs["w1o"], offs["w1r"], offs["b1"]
    o_w2, o_b2 = offs["w2"], offs["b2"]
    o_w3, o_b3 = offs["w3"], offs["b3"]
    H = hidden

    def kernel(obs_ref, rew_ref, p_ref, xexp_ref):
        # bf16 operands for the MXU; accumulate f32; elementwise stays f32.
        obs = obs_ref[...].astype(jnp.bfloat16)
        rew = rew_ref[...].astype(jnp.bfloat16)

        # Static, sublane-aligned views into the resident parameter slab.
        w1o = p_ref[o_w1o:o_w1o + obs_dim, :H]
        w1r = p_ref[o_w1r:o_w1r + rew_dim, :H]
        b1 = p_ref[o_b1:o_b1 + 1, :H].astype(jnp.float32)
        w2 = p_ref[o_w2:o_w2 + H, :H]
        b2 = p_ref[o_b2:o_b2 + 1, :H].astype(jnp.float32)
        w3 = p_ref[o_w3:o_w3 + H, :]          # (H, a_pad); padded cols are zero
        b3 = p_ref[o_b3:o_b3 + 1, :].astype(jnp.float32)

        # Fused concat: x @ W1 == obs @ W1[:obs_dim] + rew @ W1[obs_dim:]
        h1 = jnp.tanh(
            jnp.dot(obs, w1o, preferred_element_type=jnp.float32)
            + jnp.dot(rew, w1r, preferred_element_type=jnp.float32)
            + b1)
        h2 = jnp.tanh(
            jnp.dot(h1.astype(jnp.bfloat16), w2,
                    preferred_element_type=jnp.float32) + b2)
        pi = jnp.dot(h2.astype(jnp.bfloat16), w3,
                     preferred_element_type=jnp.float32) + b3   # (tile_m, a_pad)

        # sigmoid in f32; zero the padded action lanes (sigmoid(0)=0.5 would
        # otherwise corrupt the global sum taken outside the kernel).
        lane = lax.broadcasted_iota(jnp.int32, pi.shape, 1)
        x_exp = jnp.where(lane < action_dim, jax.nn.sigmoid(pi), 0.0)
        xexp_ref[...] = x_exp.astype(xexp_ref.dtype)   # unmasked 128-lane store

    return kernel


# ---------------------------------------------------------------------------
# Wrapper: batch-gridded pallas_call + tiny fused XLA normalization epilogue.
# ---------------------------------------------------------------------------
def policy_net_forward(obs, acc_reward, packed, *, tile_m=128):
    slab, offs, dims, a_pad = packed
    obs_dim, rew_dim, hidden, action_dim = dims

    if obs.ndim == 1:
        obs = obs[None, :]
    if acc_reward.ndim == 1:
        acc_reward = acc_reward[None, :]
    batch = obs.shape[0]

    # Batch tiling: pad rows up to a multiple of tile_m (padded rows are
    # sliced away before the global sum, so they never pollute it).
    tile_m = min(tile_m, _round_up(batch, 8))
    b_pad = _round_up(batch, tile_m)
    if b_pad != batch:
        obs = jnp.pad(obs, ((0, b_pad - batch), (0, 0)))
        acc_reward = jnp.pad(acc_reward, ((0, b_pad - batch), (0, 0)))

    R, C = slab.shape
    kernel = _make_kernel(offs, obs_dim, rew_dim, hidden, action_dim)

    x_exp_pad = pl.pallas_call(
        kernel,
        out_shape=jax.ShapeDtypeStruct((b_pad, a_pad), jnp.float32),
        grid_spec=pltpu.PrefetchScalarGridSpec(
            num_scalar_prefetch=0,
            grid=(b_pad // tile_m,),
            in_specs=[
                pl.BlockSpec((tile_m, obs_dim), lambda i: (i, 0)),
                pl.BlockSpec((tile_m, rew_dim), lambda i: (i, 0)),
                # Constant index map: slab DMA'd once, stays VMEM-resident.
                pl.BlockSpec((R, C), lambda i: (0, 0)),
            ],
            out_specs=pl.BlockSpec((tile_m, a_pad), lambda i: (i, 0)),
        ),
        compiler_params=pltpu.CompilerParams(
            dimension_semantics=("parallel",)),
    )(obs, acc_reward, slab)

    # Global normalization (sum over batch AND actions, exactly like
    # torch.sum(x_exp)) as a tiny fused XLA epilogue; exact divide.
    x_exp = x_exp_pad[:batch, :action_dim]
    probas = x_exp / jnp.sum(x_exp)
    return probas.reshape(-1, action_dim)


# ---------------------------------------------------------------------------
# Pure-JAX reference mirroring the PyTorch module (f32 throughout).
# ---------------------------------------------------------------------------
def _reference_forward(obs, acc_reward, params):
    w1, b1, w2, b2, w3, b3 = params
    x = jnp.concatenate([obs, acc_reward], axis=-1)
    h1 = jnp.tanh(x @ w1 + b1)
    h2 = jnp.tanh(h1 @ w2 + b2)
    pi = h2 @ w3 + b3
    x_exp = jax.nn.sigmoid(pi)
    probas = x_exp / jnp.sum(x_exp)
    return probas.reshape(-1, w3.shape[1])


def make_params(key, input_dim, hidden, action_dim):
    """Deterministic synthetic weights (shapes from PolicyNet.__init__)."""
    k1, k2, k3 = jax.random.split(key, 3)
    scale = 0.1
    w1 = scale * jax.random.normal(k1, (input_dim, hidden), jnp.float32)
    b1 = jnp.zeros((hidden,), jnp.float32)
    w2 = scale * jax.random.normal(k2, (hidden, hidden), jnp.float32)
    b2 = jnp.zeros((hidden,), jnp.float32)
    w3 = scale * jax.random.normal(k3, (hidden, action_dim), jnp.float32)
    b3 = jnp.zeros((action_dim,), jnp.float32)
    return (w1, b1, w2, b2, w3, b3)


if __name__ == "__main__":
    # Shapes consistent with the module:
    #   obs_shape=(4,), rew_dim=2 -> input_dim=6, net_arch=[32,32], action_dim=4
    # batch=256 amortizes dispatch/DMA-setup (perf review) and exercises the
    # gridded path (two 128-row tiles, resident slab).
    batch = 256
    obs_dim, rew_dim, hidden, action_dim = 4, 2, 32, 4

    key = jax.random.PRNGKey(0)
    k_obs, k_rew, k_par = jax.random.split(key, 3)

    obs = jax.random.normal(k_obs, (batch, obs_dim), jnp.float32)
    acc_reward = jax.random.normal(k_rew, (batch, rew_dim), jnp.float32)
    params = make_params(k_par, obs_dim + rew_dim, hidden, action_dim)

    slab, offs, a_pad = pack_params(params, obs_dim, rew_dim, hidden, action_dim)
    packed = (slab, offs, (obs_dim, rew_dim, hidden, action_dim), a_pad)

    fwd = jax.jit(lambda o, r: policy_net_forward(o, r, packed))
    out = jax.block_until_ready(fwd(obs, acc_reward))

    ref = _reference_forward(obs, acc_reward, params)
    assert out.shape == (batch, action_dim)
    # Probabilities over the whole tensor sum to 1 (global normalization).
    assert jnp.allclose(jnp.sum(out), 1.0, atol=1e-4)
    # bf16 matmul operands; f32 accumulation + f32 sigmoid/normalize keep the
    # result within a small tolerance of the f32 reference.
    assert jnp.allclose(out, ref, atol=5e-4, rtol=5e-3), "mismatch vs reference"

    print("KERNEL_OK")
</pallas_src>

<mosaic_0001>
module attributes {stable_mosaic.version = 11 : i64} {
  func.func @kernel(%arg0: i32, %arg1: memref<128x4xf32, #tpu.memory_space<vmem>>, %arg2: memref<128x2xf32, #tpu.memory_space<vmem>>, %arg3: memref<104x128xbf16, #tpu.memory_space<vmem>>, %arg4: memref<128x128xf32, #tpu.memory_space<vmem>>) attributes {dimension_semantics = [#tpu.dimension_semantics<parallel>], iteration_bounds = array<i64: 2>, scalar_prefetch = 0 : i64, scratch_operands = 0 : i64, tpu.core_type = #tpu.core_type<tc>, window_params = [{transform_indices = @transform_0, window_bounds = array<i64: 128, 4>}, {transform_indices = @transform_1, window_bounds = array<i64: 128, 2>}, {pipeline_mode = #tpu.pipeline_mode<synchronous>, transform_indices = @transform_2, window_bounds = array<i64: 104, 128>}, {transform_indices = @transform_3, window_bounds = array<i64: 128, 128>}]} {
    %c0 = arith.constant 0 : index
    %c0_0 = arith.constant 0 : index
    %0 = vector.load %arg1[%c0, %c0_0] : memref<128x4xf32, #tpu.memory_space<vmem>>, vector<128x4xf32>
    %1 = arith.truncf %0 : vector<128x4xf32> to vector<128x4xbf16>
    %c0_1 = arith.constant 0 : index
    %c0_2 = arith.constant 0 : index
    %2 = vector.load %arg2[%c0_1, %c0_2] : memref<128x2xf32, #tpu.memory_space<vmem>>, vector<128x2xf32>
    %3 = arith.truncf %2 : vector<128x2xf32> to vector<128x2xbf16>
    %c0_3 = arith.constant 0 : index
    %c0_4 = arith.constant 0 : index
    %4 = vector.load %arg3[%c0_3, %c0_4] : memref<104x128xbf16, #tpu.memory_space<vmem>>, vector<4x32xbf16>
    %c8 = arith.constant 8 : index
    %c0_5 = arith.constant 0 : index
    %5 = vector.load %arg3[%c8, %c0_5] : memref<104x128xbf16, #tpu.memory_space<vmem>>, vector<2x32xbf16>
    %c16 = arith.constant 16 : index
    %c0_6 = arith.constant 0 : index
    %6 = vector.load %arg3[%c16, %c0_6] : memref<104x128xbf16, #tpu.memory_space<vmem>>, vector<1x32xbf16>
    %7 = arith.extf %6 : vector<1x32xbf16> to vector<1x32xf32>
    %c24 = arith.constant 24 : index
    %c0_7 = arith.constant 0 : index
    %8 = vector.load %arg3[%c24, %c0_7] : memref<104x128xbf16, #tpu.memory_space<vmem>>, vector<32x32xbf16>
    %c56 = arith.constant 56 : index
    %c0_8 = arith.constant 0 : index
    %9 = vector.load %arg3[%c56, %c0_8] : memref<104x128xbf16, #tpu.memory_space<vmem>>, vector<1x32xbf16>
    %10 = arith.extf %9 : vector<1x32xbf16> to vector<1x32xf32>
    %c64 = arith.constant 64 : index
    %c0_9 = arith.constant 0 : index
    %11 = vector.load %arg3[%c64, %c0_9] : memref<104x128xbf16, #tpu.memory_space<vmem>>, vector<32x128xbf16>
    %c96 = arith.constant 96 : index
    %c0_10 = arith.constant 0 : index
    %12 = vector.load %arg3[%c96, %c0_10] : memref<104x128xbf16, #tpu.memory_space<vmem>>, vector<1x128xbf16>
    %13 = arith.extf %12 : vector<1x128xbf16> to vector<1x128xf32>
    %cst = arith.constant dense<0.000000e+00> : vector<128x32xf32>
    %14 = tpu.matmul %1, %4, %cst {dimension_numbers = #tpu.dot_dimension_numbers<[1], [0], [0], [1], [0, 0, 1, 1], [], []>} : vector<128x4xbf16>, vector<4x32xbf16>, vector<128x32xf32> -> vector<128x32xf32>
    %cst_11 = arith.constant dense<0.000000e+00> : vector<128x32xf32>
    %15 = tpu.matmul %3, %5, %cst_11 {dimension_numbers = #tpu.dot_dimension_numbers<[1], [0], [0], [1], [0, 0, 1, 1], [], []>} : vector<128x2xbf16>, vector<2x32xbf16>, vector<128x32xf32> -> vector<128x32xf32>
    %16 = arith.addf %14, %15 : vector<128x32xf32>
    %17 = vector.broadcast %7 : vector<1x32xf32> to vector<128x32xf32>
    %18 = arith.addf %16, %17 : vector<128x32xf32>
    %19 = math.tanh %18 : vector<128x32xf32>
    %20 = arith.truncf %19 : vector<128x32xf32> to vector<128x32xbf16>
    %cst_12 = arith.constant dense<0.000000e+00> : vector<128x32xf32>
    %21 = tpu.matmul %20, %8, %cst_12 {dimension_numbers = #tpu.dot_dimension_numbers<[1], [0], [0], [1], [0, 0, 1, 1], [], []>} : vector<128x32xbf16>, vector<32x32xbf16>, vector<128x32xf32> -> vector<128x32xf32>
    %22 = vector.broadcast %10 : vector<1x32xf32> to vector<128x32xf32>
    %23 = arith.addf %21, %22 : vector<128x32xf32>
    %24 = math.tanh %23 : vector<128x32xf32>
    %25 = arith.truncf %24 : vector<128x32xf32> to vector<128x32xbf16>
    %cst_13 = arith.constant dense<0.000000e+00> : vector<128x128xf32>
    %26 = tpu.matmul %25, %11, %cst_13 {dimension_numbers = #tpu.dot_dimension_numbers<[1], [0], [0], [1], [0, 0, 1, 1], [], []>} : vector<128x32xbf16>, vector<32x128xbf16>, vector<128x128xf32> -> vector<128x128xf32>
    %27 = vector.broadcast %13 : vector<1x128xf32> to vector<128x128xf32>
    %28 = arith.addf %26, %27 : vector<128x128xf32>
    %29 = tpu.iota {dimensions = array<i32: 1>} : vector<128x128xi32>
    %c4_i32 = arith.constant 4 : i32
    %30 = vector.broadcast %c4_i32 : i32 to vector<128x128xi32>
    %31 = arith.cmpi slt, %29, %30 : vector<128x128xi32>
    %32 = arith.negf %28 : vector<128x128xf32>
    %33 = math.exp %32 : vector<128x128xf32>
    %cst_14 = arith.constant 1.000000e+00 : f32
    %34 = vector.broadcast %cst_14 : f32 to vector<128x128xf32>
    %35 = arith.addf %34, %33 : vector<128x128xf32>
    %36 = arith.divf %34, %35 : vector<128x128xf32>
    %cst_15 = arith.constant 0.000000e+00 : f32
    %37 = vector.broadcast %cst_15 : f32 to vector<128x128xf32>
    %38 = arith.select %31, %36, %37 : vector<128x128xi1>, vector<128x128xf32>
    %c0_16 = arith.constant 0 : index
    %c0_17 = arith.constant 0 : index
    %39 = vector.load %arg4[%c0_16, %c0_17] : memref<128x128xf32, #tpu.memory_space<vmem>>, vector<128x128xf32>
    tpu.vector_store %arg4[%c0_16, %c0_17], %38 {strides = array<i32>} : memref<128x128xf32, #tpu.memory_space<vmem>>, vector<128x128xf32>,
    return
  }
  func.func @transform_0(%arg0: i32) -> (i32, i32) {
    %c0_i32 = arith.constant 0 : i32
    %c0_i32_0 = arith.constant 0 : i32
    return %arg0, %c0_i32 : i32, i32
  }
  func.func @transform_1(%arg0: i32) -> (i32, i32) {
    %c0_i32 = arith.constant 0 : i32
    %c0_i32_0 = arith.constant 0 : i32
    return %arg0, %c0_i32 : i32, i32
  }
  func.func @transform_2(%arg0: i32) -> (i32, i32) {
    %c0_i32 = arith.constant 0 : i32
    %c0_i32_0 = arith.constant 0 : i32
    %c0_i32_1 = arith.constant 0 : i32
    return %c0_i32, %c0_i32_0 : i32, i32
  }
  func.func @transform_3(%arg0: i32) -> (i32, i32) {
    %c0_i32 = arith.constant 0 : i32
    %c0_i32_0 = arith.constant 0 : i32
    return %arg0, %c0_i32 : i32, i32
  }
}

</mosaic_0001>

<llo_original>
// kernel: _lambda_.1
$region0: #{_lambda_.1}
  #allocation0 [shape = 'u32[]', space=smem, size = 0x4, offset = 0x4, fixed_abs, tag = 'smem constant byte address 0x4 - core index']
  #allocation1 [shape = 'u32[72,128]{1,0:T(1,128)}', space=vmem, size = 0x9000, scoped, tag = 'internal scratch']
  %s0 = inlined_call_operand.vmem [shape: f32[256,4], index: 0, kind: input, shape index: {}]
  %s1 = inlined_call_operand.vmem [shape: f32[256,2], index: 1, kind: input, shape index: {}]
  %s2 = inlined_call_operand.vmem [shape: bf16[104,128], index: 2, kind: input, shape index: {}]
  %s3 = inlined_call_operand.vmem [shape: f32[256,128], index: 3, kind: output, shape index: {}]
  %s4 = sld [smem:[#allocation0]]
  $region45: #{_lambda_.1} parent=0
    _
  %s6 = ssub.s32 1, %s4
  %s7 = scalar_select 0, %s6, %s4
  loop: start=0, step=1, limit=4
  $region2: #{_lambda_.1} parent=0 // loop_pre_header
    _
  $region3: #{_lambda_.1} parent=0 // loop_header
    %s9 = sphi 0, %s13
    %p10 = scmp.ge.s32.totalorder %s9, 4
    %s19 = sphi 0, %s21
    %s22 = sphi 0, %s19
    %s23 = sphi 0, %s22
    %s39 = sphi 0, %s23
    %s45 = sphi 0, %s47
    %s48 = sphi 0, %s45
    %s49 = sphi 0, %s48
    %s65 = sphi 0, %s49
    %s69 = sphi 0, %s69
    %s71 = sphi 0, %s69
    %s72 = sphi 0, %s71
    %s86 = sphi 0, %s72
    %s92 = sphi 0, %s94
    %s95 = sphi 0, %s92
    %s96 = sphi 0, %s95
    %s112 = sphi 0, %s96
  $region4: #{_lambda_.1} parent=0 // loop_header_branch
    %12 = sbr.rel (%p10) target = $region8
  $region5: #{_lambda_.1} parent=0 // loop_body
    %s14 = ssub.s32 %s9, 1
    %s15 = ssub.s32 %s9, 2
    %s16 = sadd.s32 %s9, 1
    %s17 = ssub.s32 %s9, %s16
    %p18 = scmp.eq.s32.totalorder %s17, 0
    %s20 = sadd.s32 %s19, 1
    %s21 = scalar_select %p18, %s19, %s20
    %p24 = pneg %p18
    %p25 = scmp.eq.s32.totalorder %s9, 1
    %p26 = por %p24, %p25
    %p27 = scmp.ne.s32.totalorder %s19, %s22
    %p28 = scmp.eq.s32.totalorder %s9, 0
    %p29 = por %p27, %p28
    %p30 = scmp.ne.s32.totalorder %s19, %s22
    %p31 = scmp.eq.s32.totalorder %s14, 1
    %p32 = por %p30, %p31
    %p33 = scmp.ne.s32.totalorder %s22, %s23
    %p34 = scmp.eq.s32.totalorder %s14, 0
    %p35 = por %p33, %p34
    %p36 = scmp.ne.s32.totalorder %s22, %s23
    %p37 = scmp.eq.s32.totalorder %s15, 1
    %p38 = por %p36, %p37
    %p40 = scmp.ne.s32.totalorder %s23, %s39
    %p41 = scmp.eq.s32.totalorder %s15, 0
    %p42 = por %p40, %p41
    %s43 = ssub.s32 %s9, %s16
    %p44 = scmp.eq.s32.totalorder %s43, 0
    %s46 = sadd.s32 %s45, 1
    %s47 = scalar_select %p44, %s45, %s46
    %p50 = pneg %p44
    %p51 = scmp.eq.s32.totalorder %s9, 1
    %p52 = por %p50, %p51
    %p53 = scmp.ne.s32.totalorder %s45, %s48
    %p54 = scmp.eq.s32.totalorder %s9, 0
    %p55 = por %p53, %p54
    %p56 = scmp.ne.s32.totalorder %s45, %s48
    %p57 = scmp.eq.s32.totalorder %s14, 1
    %p58 = por %p56, %p57
    %p59 = scmp.ne.s32.totalorder %s48, %s49
    %p60 = scmp.eq.s32.totalorder %s14, 0
    %p61 = por %p59, %p60
    %p62 = scmp.ne.s32.totalorder %s48, %s49
    %p63 = scmp.eq.s32.totalorder %s15, 1
    %p64 = por %p62, %p63
    %p66 = scmp.ne.s32.totalorder %s49, %s65
    %p67 = scmp.eq.s32.totalorder %s15, 0
    %p68 = por %p66, %p67
    %s70 = sadd.s32 %s69, 1
    %p73 = scmp.eq.s32.totalorder %s9, 1
    %p74 = scmp.ne.s32.totalorder %s69, %s71
    %p75 = scmp.eq.s32.totalorder %s9, 0
    %p76 = por %p74, %p75
    %p77 = scmp.ne.s32.totalorder %s69, %s71
    %p78 = scmp.eq.s32.totalorder %s14, 1
    %p79 = por %p77, %p78
    %p80 = scmp.ne.s32.totalorder %s71, %s72
    %p81 = scmp.eq.s32.totalorder %s14, 0
    %p82 = por %p80, %p81
    %p83 = scmp.ne.s32.totalorder %s71, %s72
    %p84 = scmp.eq.s32.totalorder %s15, 1
    %p85 = por %p83, %p84
    %p87 = scmp.ne.s32.totalorder %s72, %s86
    %p88 = scmp.eq.s32.totalorder %s15, 0
    %p89 = por %p87, %p88
    %s90 = ssub.s32 %s9, %s16
    %p91 = scmp.eq.s32.totalorder %s90, 0
    %s93 = sadd.s32 %s92, 1
    %s94 = scalar_select %p91, %s92, %s93
    %p97 = pneg %p91
    %p98 = scmp.eq.s32.totalorder %s9, 1
    %p99 = por %p97, %p98
    %p100 = scmp.ne.s32.totalorder %s92, %s95
    %p101 = scmp.eq.s32.totalorder %s9, 0
    %p102 = por %p100, %p101
    %p103 = scmp.ne.s32.totalorder %s92, %s95
    %p104 = scmp.eq.s32.totalorder %s14, 1
    %p105 = por %p103, %p104
    %p106 = scmp.ne.s32.totalorder %s95, %s96
    %p107 = scmp.eq.s32.totalorder %s14, 0
    %p108 = por %p106, %p107
    %p109 = scmp.ne.s32.totalorder %s95, %s96
    %p110 = scmp.eq.s32.totalorder %s15, 1
    %p111 = por %p109, %p110
    %p113 = scmp.ne.s32.totalorder %s96, %s112
    %p114 = scmp.eq.s32.totalorder %s15, 0
    %p115 = por %p113, %p114
    %p116 = scmp.le.s32.totalorder 1, %s9
    %p117 = scmp.lt.s32.totalorder %s9, 3
    %p118 = pnand %p116, %p117
    %p119 = pneg %p118
    // Predicated region
    $region9: #{_lambda_.1} parent=5 // pred_check
      _
    $region10: #{_lambda_.1} parent=5 // pred_check_branch
      %121 = sbr.rel (%p118) target = $region12
    $region11: #{_lambda_.1} parent=5 // pred_region
      %s122 = ssub.s32 %s9, 1
      // Predicated region
      $region13: #{_lambda_.1} parent=11 // pred_check
        %p123 = pneg %p82
      $region14: #{_lambda_.1} parent=11 // pred_check_branch
        %125 = sbr.rel (%p123) target = $region16
      $region15: #{_lambda_.1} parent=11 // pred_region
        _
      $region16: #{_lambda_.1} parent=11 // pred_fallthru
        _
    $region12: #{_lambda_.1} parent=5 // pred_fallthru
      _
    %p126 = scmp.lt.s32.totalorder %s9, 2
    // Predicated region
    $region17: #{_lambda_.1} parent=5 // pred_check
      %p127 = pneg %p126
    $region18: #{_lambda_.1} parent=5 // pred_check_branch
      %129 = sbr.rel (%p127) target = $region20
    $region19: #{_lambda_.1} parent=5 // pred_region
      // Predicated region
      $region21: #{_lambda_.1} parent=19 // pred_check
        %p130 = pneg %p29
      $region22: #{_lambda_.1} parent=19 // pred_check_branch
        %132 = sbr.rel (%p130) target = $region24
      $region23: #{_lambda_.1} parent=19 // pred_region
        %s133 = smul.u32 16, %s9
        %p134 = scmp.lt.s32.totalorder %s133, 31
        %s135 = scalar_select %p134, %s133, 31
        %s136 = smul.addr %s135, 8
        %s137 = scalar_lea.vmem %s0, %s136
        %s138 = smul.u32 16, %s9
      $region24: #{_lambda_.1} parent=19 // pred_fallthru
        _
      // Predicated region
      $region25: #{_lambda_.1} parent=19 // pred_check
        %p139 = pneg %p55
      $region26: #{_lambda_.1} parent=19 // pred_check_branch
        %141 = sbr.rel (%p139) target = $region28
      $region27: #{_lambda_.1} parent=19 // pred_region
        %s142 = smul.u32 16, %s9
        %p143 = scmp.lt.s32.totalorder %s142, 31
        %s144 = scalar_select %p143, %s142, 31
        %s145 = smul.addr %s144, 8
        %s146 = scalar_lea.vmem %s1, %s145
        %s147 = smul.u32 16, %s9
      $region28: #{_lambda_.1} parent=19 // pred_fallthru
        _
    $region20: #{_lambda_.1} parent=5 // pred_fallthru
      _
    %p148 = scmp.le.s32.totalorder 1, %s9
    %p149 = scmp.lt.s32.totalorder %s9, 3
    %p150 = pnand %p148, %p149
    %p151 = pneg %p150
    // Predicated region
    $region29: #{_lambda_.1} parent=5 // pred_check
      _
    $region30: #{_lambda_.1} parent=5 // pred_check_branch
      %153 = sbr.rel (%p150) target = $region32
    $region31: #{_lambda_.1} parent=5 // pred_region
      %s154 = ssub.s32 %s9, 1
      %s155 = smul.u32 16, %s14
      %p156 = scmp.lt.s32.totalorder %s155, 31
      %s157 = scalar_select %p156, %s155, 31
      %s158 = smul.addr %s157, 8
      %s159 = scalar_lea.vmem %s0, %s158
      %p160 = pneg %p35
      %p161 = pneg %p32
      %s162 = smul.u32 16, %s14
      %p163 = scmp.lt.s32.totalorder %s162, 31
      %s164 = scalar_select %p163, %s162, 31
      %s165 = smul.addr %s164, 8
      %s166 = scalar_lea.vmem %s1, %s165
      %p167 = pneg %p61
      %p168 = pneg %p58
      %p169 = pneg %p82
      %p170 = pneg %p79
      %p171 = pneg %p108
      %p172 = pneg %p105
      %s173 = smul.u32 16, %s14
      %p174 = scmp.lt.s32.totalorder %s173, 31
      %s175 = scalar_select %p174, %s173, 31
      %s176 = smul.addr %s175, 8
      %s177 = scalar_lea.vmem %s3, %s176
      %s178 = smul.u32 16, %s14
      %p179 = scmp.lt.s32.totalorder %s178, 31
      %s180 = scalar_select %p179, %s178, 31
      %s181 = smul.addr %s180, 8
      %s182 = scalar_lea.vmem %s0, %s181
      %s183 = smul.u32 16, %s14
      %s184 = smul.u32 16, %s14
      %p185 = scmp.lt.s32.totalorder %s184, 31
      %s186 = scalar_select %p185, %s184, 31
      %s187 = smul.addr %s186, 8
      %s188 = scalar_lea.vmem %s1, %s187
      %s189 = smul.u32 16, %s14
      %s190 = smul.u32 16, %s14
      %p191 = scmp.lt.s32.totalorder %s190, 31
      %s192 = scalar_select %p191, %s190, 31
      %s193 = smul.addr %s192, 8
      %s194 = scalar_lea.vmem %s3, %s193
      %s195 = smul.u32 16, %s14
      %v197 = vld [vmem:[%s182] sm:$0xff]
      %v198 = vld [vmem:[%s182 + $0x8] sm:$0xff]
      %v199 = vld [vmem:[%s182 + $0x10] sm:$0xff]
      %v200 = vld [vmem:[%s182 + $0x18] sm:$0xff]
      %v201 = vld [vmem:[%s182 + $0x20] sm:$0xff]
      %v202 = vld [vmem:[%s182 + $0x28] sm:$0xff]
      %v203 = vld [vmem:[%s182 + $0x30] sm:$0xff]
      %v204 = vld [vmem:[%s182 + $0x38] sm:$0xff]
      %v205 = vld [vmem:[%s182 + $0x40] sm:$0xff]
      %v206 = vld [vmem:[%s182 + $0x48] sm:$0xff]
      %v207 = vld [vmem:[%s182 + $0x50] sm:$0xff]
      %v208 = vld [vmem:[%s182 + $0x58] sm:$0xff]
      %v209 = vld [vmem:[%s182 + $0x60] sm:$0xff]
      %v210 = vld [vmem:[%s182 + $0x68] sm:$0xff]
      %v211 = vld [vmem:[%s182 + $0x70] sm:$0xff]
      %v212 = vld [vmem:[%s182 + $0x78] sm:$0xff]
      %v213 = vpack.c.bf16 %v198, %v197
      %v214 = vpack.c.bf16 %v200, %v199
      %v215 = vpack.c.bf16 %v202, %v201
      %v216 = vpack.c.bf16 %v204, %v203
      %v217 = vpack.c.bf16 %v206, %v205
      %v218 = vpack.c.bf16 %v208, %v207
      %v219 = vpack.c.bf16 %v210, %v209
      %v220 = vpack.c.bf16 %v212, %v211
      %v221 = vld [vmem:[%s188] sm:$0xff]
      %v222 = vld [vmem:[%s188 + $0x8] sm:$0xff]
      %v223 = vld [vmem:[%s188 + $0x10] sm:$0xff]
      %v224 = vld [vmem:[%s188 + $0x18] sm:$0xff]
      %v225 = vld [vmem:[%s188 + $0x20] sm:$0xff]
      %v226 = vld [vmem:[%s188 + $0x28] sm:$0xff]
      %v227 = vld [vmem:[%s188 + $0x30] sm:$0xff]
      %v228 = vld [vmem:[%s188 + $0x38] sm:$0xff]
      %v229 = vld [vmem:[%s188 + $0x40] sm:$0xff]
      %v230 = vld [vmem:[%s188 + $0x48] sm:$0xff]
      %v231 = vld [vmem:[%s188 + $0x50] sm:$0xff]
      %v232 = vld [vmem:[%s188 + $0x58] sm:$0xff]
      %v233 = vld [vmem:[%s188 + $0x60] sm:$0xff]
      %v234 = vld [vmem:[%s188 + $0x68] sm:$0xff]
      %v235 = vld [vmem:[%s188 + $0x70] sm:$0xff]
      %v236 = vld [vmem:[%s188 + $0x78] sm:$0xff]
      %v237 = vpack.c.bf16 %v222, %v221
      %v238 = vpack.c.bf16 %v224, %v223
      %v239 = vpack.c.bf16 %v226, %v225
      %v240 = vpack.c.bf16 %v228, %v227
      %v241 = vpack.c.bf16 %v230, %v229
      %v242 = vpack.c.bf16 %v232, %v231
      %v243 = vpack.c.bf16 %v234, %v233
      %v244 = vpack.c.bf16 %v236, %v235
      %v245 = vld [vmem:[%s2] sm:$0x3]
      %v246 = vld [vmem:[%s2 + $0x4] sm:$0x1]
      %v247 = vld [vmem:[%s2 + $0x8] sm:$0x1]
      %v248 = vunpack.c.l.bf16 %v247
      %v249 = vld [vmem:[%s2 + $0xc] sm:$0xf]
      %v250 = vld [vmem:[%s2 + $0x10] sm:$0xf]
      %v251 = vld [vmem:[%s2 + $0x14] sm:$0xf]
      %v252 = vld [vmem:[%s2 + $0x18] sm:$0xf]
      %v253 = vld [vmem:[%s2 + $0x1c] sm:$0x1]
      %v254 = vunpack.c.l.bf16 %v253
      %v255 = vld [vmem:[%s2 + $0x20] sm:$0xf]
      %v256 = vld [vmem:[%s2 + $0x24] sm:$0xf]
      %v257 = vld [vmem:[%s2 + $0x28] sm:$0xf]
      %v258 = vld [vmem:[%s2 + $0x2c] sm:$0xf]
      %v259 = vld [vmem:[%s2 + $0x30] sm:$0x1]
      %v260 = vunpack.c.l.bf16 %v259
      %vm261 = vcmask 15360
      %v263 = vsel %vm261, %v237, 0
      %v266 = vsel %vm261, %v238, 0
      %v269 = vsel %vm261, %v239, 0
      %v272 = vsel %vm261, %v240, 0
      %v275 = vsel %vm261, %v241, 0
      %v278 = vsel %vm261, %v242, 0
      %v281 = vsel %vm261, %v243, 0
      %v284 = vsel %vm261, %v244, 0
      %vm286 = vcmask 1040384
      %v288 = vsel %vm286, %v246, 0
      %290 = vmatpush.bf16.msra.mxu0 0
      %291 = vmatpush.bf16.msra.mxu0 0
      %292 = vmatpush.bf16.msra.mxu0 0
      %293 = vmatpush.bf16.msra.mxu0 0
      %294 = vmatpush.bf16.msra.mxu0 0
      %295 = vmatpush.bf16.msra.mxu0 0
      %296 = vmatpush.bf16.msra.mxu0 0
      %297 = vmatpush.bf16.msra.mxu0 %v288
      %298 = vmatmul.bf16.gmra.mxu0 %v263
      %v299 = vpop.f32.mrf.mxu0
      %v300 = vadd.f32 0.0, %v299
      %v301 = vpop.f32.mrf.mxu0
      %v302 = vadd.f32 0.0, %v301
      %303 = vmatmul.bf16.gmra.mxu0 %v266
      %v304 = vpop.f32.mrf.mxu0
      %v305 = vadd.f32 0.0, %v304
      %v306 = vpop.f32.mrf.mxu0
      %v307 = vadd.f32 0.0, %v306
      %308 = vmatmul.bf16.gmra.mxu0 %v269
      %v309 = vpop.f32.mrf.mxu0
      %v310 = vadd.f32 0.0, %v309
      %v311 = vpop.f32.mrf.mxu0
      %v312 = vadd.f32 0.0, %v311
      %313 = vmatmul.bf16.gmra.mxu0 %v272
      %v314 = vpop.f32.mrf.mxu0
      %v315 = vadd.f32 0.0, %v314
      %v316 = vpop.f32.mrf.mxu0
      %v317 = vadd.f32 0.0, %v316
      %318 = vmatmul.bf16.gmra.mxu0 %v275
      %v319 = vpop.f32.mrf.mxu0
      %v320 = vadd.f32 0.0, %v319
      %v321 = vpop.f32.mrf.mxu0
      %v322 = vadd.f32 0.0, %v321
      %323 = vmatmul.bf16.gmra.mxu0 %v278
      %v324 = vpop.f32.mrf.mxu0
      %v325 = vadd.f32 0.0, %v324
      %v326 = vpop.f32.mrf.mxu0
      %v327 = vadd.f32 0.0, %v326
      %328 = vmatmul.bf16.gmra.mxu0 %v281
      %v329 = vpop.f32.mrf.mxu0
      %v330 = vadd.f32 0.0, %v329
      %v331 = vpop.f32.mrf.mxu0
      %v332 = vadd.f32 0.0, %v331
      %333 = vmatmul.bf16.gmra.mxu0 %v284
      %v334 = vpop.f32.mrf.mxu0
      %v335 = vadd.f32 0.0, %v334
      %v336 = vpop.f32.mrf.mxu0
      %v337 = vadd.f32 0.0, %v336
      %338 = vdwg.mxu0
      %vm339 = vcmask 31744
      %v341 = vsel %vm339, %v213, 0
      %v344 = vsel %vm339, %v214, 0
      %v347 = vsel %vm339, %v215, 0
      %v350 = vsel %vm339, %v216, 0
      %v353 = vsel %vm339, %v217, 0
      %v356 = vsel %vm339, %v218, 0
      %v359 = vsel %vm339, %v219, 0
      %v362 = vsel %vm339, %v220, 0
      %vm364 = vcmask 1041408
      %v366 = vsel %vm364, %v245, 0
      %368 = vmatpush.bf16.msra.mxu0 0
      %369 = vmatpush.bf16.msra.mxu0 0
      %370 = vmatpush.bf16.msra.mxu0 0
      %371 = vmatpush.bf16.msra.mxu0 0
      %372 = vmatpush.bf16.msra.mxu0 0
      %373 = vmatpush.bf16.msra.mxu0 0
      %374 = vmatpush.bf16.msra.mxu0 0
      %375 = vmatpush.bf16.msra.mxu0 %v366
      %376 = vmatmul.bf16.gmra.mxu0 %v341
      %v377 = vpop.f32.mrf.mxu0
      %v378 = vadd.f32 %v300, %v377
      %v379 = vpop.f32.mrf.mxu0
      %v380 = vadd.f32 %v302, %v379
      %381 = vmatmul.bf16.gmra.mxu0 %v344
      %v382 = vpop.f32.mrf.mxu0
      %v383 = vadd.f32 %v305, %v382
      %v384 = vpop.f32.mrf.mxu0
      %v385 = vadd.f32 %v307, %v384
      %386 = vmatmul.bf16.gmra.mxu0 %v347
      %v387 = vpop.f32.mrf.mxu0
      %v388 = vadd.f32 %v310, %v387
      %v389 = vpop.f32.mrf.mxu0
      %v390 = vadd.f32 %v312, %v389
      %391 = vmatmul.bf16.gmra.mxu0 %v350
      %v392 = vpop.f32.mrf.mxu0
      %v393 = vadd.f32 %v315, %v392
      %v394 = vpop.f32.mrf.mxu0
      %v395 = vadd.f32 %v317, %v394
      %396 = vmatmul.bf16.gmra.mxu0 %v353
      %v397 = vpop.f32.mrf.mxu0
      %v398 = vadd.f32 %v320, %v397
      %v399 = vpop.f32.mrf.mxu0
      %v400 = vadd.f32 %v322, %v399
      %401 = vmatmul.bf16.gmra.mxu0 %v356
      %v402 = vpop.f32.mrf.mxu0
      %v403 = vadd.f32 %v325, %v402
      %v404 = vpop.f32.mrf.mxu0
      %v405 = vadd.f32 %v327, %v404
      %406 = vmatmul.bf16.gmra.mxu0 %v359
      %v407 = vpop.f32.mrf.mxu0
      %v408 = vadd.f32 %v330, %v407
      %v409 = vpop.f32.mrf.mxu0
      %v410 = vadd.f32 %v332, %v409
      %411 = vmatmul.bf16.gmra.mxu0 %v362
      %v412 = vpop.f32.mrf.mxu0
      %v413 = vadd.f32 %v335, %v412
      %v414 = vpop.f32.mrf.mxu0
      %v415 = vadd.f32 %v337, %v414
      %416 = vdwg.mxu0
      %v417 = vperm.slane %v248, 0
      %v418 = vadd.f32 %v378, %v417
      %v419 = vadd.f32 %v380, %v417
      %v420 = vadd.f32 %v383, %v417
      %v421 = vadd.f32 %v385, %v417
      %v422 = vadd.f32 %v388, %v417
      %v423 = vadd.f32 %v390, %v417
      %v424 = vadd.f32 %v393, %v417
      %v425 = vadd.f32 %v395, %v417
      %v426 = vadd.f32 %v398, %v417
      %v427 = vadd.f32 %v400, %v417
      %v428 = vadd.f32 %v403, %v417
      %v429 = vadd.f32 %v405, %v417
      %v430 = vadd.f32 %v408, %v417
      %v431 = vadd.f32 %v410, %v417
      %v432 = vadd.f32 %v413, %v417
      %v433 = vadd.f32 %v415, %v417
      %v434 = vtanh.pop %v418
      %v435 = vtanh.pop %v419
      %v436 = vtanh.pop %v420
      %v437 = vtanh.pop %v421
      %v438 = vtanh.pop %v422
      %v439 = vtanh.pop %v423
      %v440 = vtanh.pop %v424
      %v441 = vtanh.pop %v425
      %v442 = vtanh.pop %v426
      %v443 = vtanh.pop %v427
      %v444 = vtanh.pop %v428
      %v445 = vtanh.pop %v429
      %v446 = vtanh.pop %v430
      %v447 = vtanh.pop %v431
      %v448 = vtanh.pop %v432
      %v449 = vtanh.pop %v433
      %v450 = vpack.c.bf16 %v435, %v434
      %v451 = vpack.c.bf16 %v437, %v436
      %v452 = vpack.c.bf16 %v439, %v438
      %v453 = vpack.c.bf16 %v441, %v440
      %v454 = vpack.c.bf16 %v443, %v442
      %v455 = vpack.c.bf16 %v445, %v444
      %v456 = vpack.c.bf16 %v447, %v446
      %v457 = vpack.c.bf16 %v449, %v448
      %v458 = vperm.slane %v254, 0
      %v463 = vunpack.c.l.b16 %v249
      %v464 = vunpack.c.l.b16 %v250
      %v465 = vunpack.c.l.b16 %v251
      %v466 = vunpack.c.l.b16 %v252
      %v467 = vpack.c.b16 %v464, %v463
      %v468 = vpack.c.b16 %v466, %v465
      %vm471 = vcmask 261120
      %v473 = vsel %vm471, %v450, 0
      %v476 = vsel %vm471, %v451, 0
      %v479 = vsel %vm471, %v452, 0
      %v482 = vsel %vm471, %v453, 0
      %v485 = vsel %vm471, %v454, 0
      %v488 = vsel %vm471, %v455, 0
      %v491 = vsel %vm471, %v456, 0
      %v494 = vsel %vm471, %v457, 0
      %496 = vmatpush.bf16.msra.mxu0 0
      %497 = vmatpush.bf16.msra.mxu0 0
      %498 = vmatpush.bf16.msra.mxu0 0
      %499 = vmatpush.bf16.msra.mxu0 0
      %500 = vmatpush.bf16.msra.mxu0 0
      %501 = vmatpush.bf16.msra.mxu0 0
      %502 = vmatpush.bf16.msra.mxu0 %v468
      %503 = vmatpush.bf16.msra.mxu0 %v467
      %504 = vmatmul.bf16.gmra.mxu0 %v473
      %v505 = vpop.f32.mrf.mxu0
      %v506 = vadd.f32 %v458, %v505
      %v507 = vpop.f32.mrf.mxu0
      %v508 = vadd.f32 %v458, %v507
      %509 = vmatmul.bf16.gmra.mxu0 %v476
      %v510 = vpop.f32.mrf.mxu0
      %v511 = vadd.f32 %v458, %v510
      %v512 = vpop.f32.mrf.mxu0
      %v513 = vadd.f32 %v458, %v512
      %514 = vmatmul.bf16.gmra.mxu0 %v479
      %v515 = vpop.f32.mrf.mxu0
      %v516 = vadd.f32 %v458, %v515
      %v517 = vpop.f32.mrf.mxu0
      %v518 = vadd.f32 %v458, %v517
      %519 = vmatmul.bf16.gmra.mxu0 %v482
      %v520 = vpop.f32.mrf.mxu0
      %v521 = vadd.f32 %v458, %v520
      %v522 = vpop.f32.mrf.mxu0
      %v523 = vadd.f32 %v458, %v522
      %524 = vmatmul.bf16.gmra.mxu0 %v485
      %v525 = vpop.f32.mrf.mxu0
      %v526 = vadd.f32 %v458, %v525
      %v527 = vpop.f32.mrf.mxu0
      %v528 = vadd.f32 %v458, %v527
      %529 = vmatmul.bf16.gmra.mxu0 %v488
      %v530 = vpop.f32.mrf.mxu0
      %v531 = vadd.f32 %v458, %v530
      %v532 = vpop.f32.mrf.mxu0
      %v533 = vadd.f32 %v458, %v532
      %534 = vmatmul.bf16.gmra.mxu0 %v491
      %v535 = vpop.f32.mrf.mxu0
      %v536 = vadd.f32 %v458, %v535
      %v537 = vpop.f32.mrf.mxu0
      %v538 = vadd.f32 %v458, %v537
      %539 = vmatmul.bf16.gmra.mxu0 %v494
      %v540 = vpop.f32.mrf.mxu0
      %v541 = vadd.f32 %v458, %v540
      %v542 = vpop.f32.mrf.mxu0
      %v543 = vadd.f32 %v458, %v542
      %544 = vdwg.mxu0
      %v545 = vtanh.pop %v506
      %v546 = vtanh.pop %v508
      %v547 = vtanh.pop %v511
      %v548 = vtanh.pop %v513
      %v549 = vtanh.pop %v516
      %v550 = vtanh.pop %v518
      %v551 = vtanh.pop %v521
      %v552 = vtanh.pop %v523
      %v553 = vtanh.pop %v526
      %v554 = vtanh.pop %v528
      %v555 = vtanh.pop %v531
      %v556 = vtanh.pop %v533
      %v557 = vtanh.pop %v536
      %v558 = vtanh.pop %v538
      %v559 = vtanh.pop %v541
      %v560 = vtanh.pop %v543
      %v561 = vpack.c.bf16 %v546, %v545
      %v562 = vpack.c.bf16 %v548, %v547
      %v563 = vpack.c.bf16 %v550, %v549
      %v564 = vpack.c.bf16 %v552, %v551
      %v565 = vpack.c.bf16 %v554, %v553
      %v566 = vpack.c.bf16 %v556, %v555
      %v567 = vpack.c.bf16 %v558, %v557
      %v568 = vpack.c.bf16 %v560, %v559
      %v569 = vperm.slane %v260, 0
      %v574 = vunpack.c.l.b16 %v255
      %v575 = vunpack.c.l.b16 %v256
      %v576 = vunpack.c.l.b16 %v257
      %v577 = vunpack.c.l.b16 %v258
      %v578 = vpack.c.b16 %v575, %v574
      %v579 = vpack.c.b16 %v577, %v576
      %v583 = vsel %vm471, %v561, 0
      %v586 = vsel %vm471, %v562, 0
      %v589 = vsel %vm471, %v563, 0
      %v592 = vsel %vm471, %v564, 0
      %v595 = vsel %vm471, %v565, 0
      %v598 = vsel %vm471, %v566, 0
      %v601 = vsel %vm471, %v567, 0
      %v604 = vsel %vm471, %v568, 0
      %606 = vmatpush.bf16.msra.mxu0 0
      %607 = vmatpush.bf16.msra.mxu0 0
      %608 = vmatpush.bf16.msra.mxu0 0
      %609 = vmatpush.bf16.msra.mxu0 0
      %610 = vmatpush.bf16.msra.mxu0 0
      %611 = vmatpush.bf16.msra.mxu0 0
      %612 = vmatpush.bf16.msra.mxu0 %v579
      %613 = vmatpush.bf16.msra.mxu0 %v578
      %614 = vmatmul.bf16.gmra.mxu0 %v583
      %v615 = vpop.f32.mrf.mxu0
      %v616 = vadd.f32 %v569, %v615
      %v617 = vpop.f32.mrf.mxu0
      %v618 = vadd.f32 %v569, %v617
      %619 = vmatmul.bf16.gmra.mxu0 %v586
      %v620 = vpop.f32.mrf.mxu0
      %v621 = vadd.f32 %v569, %v620
      %v622 = vpop.f32.mrf.mxu0
      %v623 = vadd.f32 %v569, %v622
      %624 = vmatmul.bf16.gmra.mxu0 %v589
      %v625 = vpop.f32.mrf.mxu0
      %v626 = vadd.f32 %v569, %v625
      %v627 = vpop.f32.mrf.mxu0
      %v628 = vadd.f32 %v569, %v627
      %629 = vmatmul.bf16.gmra.mxu0 %v592
      %v630 = vpop.f32.mrf.mxu0
      %v631 = vadd.f32 %v569, %v630
      %v632 = vpop.f32.mrf.mxu0
      %v633 = vadd.f32 %v569, %v632
      %634 = vmatmul.bf16.gmra.mxu0 %v595
      %v635 = vpop.f32.mrf.mxu0
      %v636 = vadd.f32 %v569, %v635
      %v637 = vpop.f32.mrf.mxu0
      %v638 = vadd.f32 %v569, %v637
      %639 = vmatmul.bf16.gmra.mxu0 %v598
      %v640 = vpop.f32.mrf.mxu0
      %v641 = vadd.f32 %v569, %v640
      %v642 = vpop.f32.mrf.mxu0
      %v643 = vadd.f32 %v569, %v642
      %644 = vmatmul.bf16.gmra.mxu0 %v601
      %v645 = vpop.f32.mrf.mxu0
      %v646 = vadd.f32 %v569, %v645
      %v647 = vpop.f32.mrf.mxu0
      %v648 = vadd.f32 %v569, %v647
      %649 = vmatmul.bf16.gmra.mxu0 %v604
      %v650 = vpop.f32.mrf.mxu0
      %v651 = vadd.f32 %v569, %v650
      %v652 = vpop.f32.mrf.mxu0
      %v653 = vadd.f32 %v569, %v652
      %654 = vdwg.mxu0
      %v655 = vlaneseq
      %v656 = vand.u32 %v655, 127
      %vm657 = vcmp.lt.s32.totalorder %v656, 4
      %v658 = vxor.u32 %v616, 2147483648
      %v659 = vxor.u32 %v618, 2147483648
      %v660 = vxor.u32 %v621, 2147483648
      %v661 = vxor.u32 %v623, 2147483648
      %v662 = vxor.u32 %v626, 2147483648
      %v663 = vxor.u32 %v628, 2147483648
      %v664 = vxor.u32 %v631, 2147483648
      %v665 = vxor.u32 %v633, 2147483648
      %v666 = vxor.u32 %v636, 2147483648
      %v667 = vxor.u32 %v638, 2147483648
      %v668 = vxor.u32 %v641, 2147483648
      %v669 = vxor.u32 %v643, 2147483648
      %v670 = vxor.u32 %v646, 2147483648
      %v671 = vxor.u32 %v648, 2147483648
      %v672 = vxor.u32 %v651, 2147483648
      %v673 = vxor.u32 %v653, 2147483648
      %v674 = vmul.f32 %v658, 1.442695
      %v675 = vpow.pop %v674
      %v676 = vmul.f32 %v659, 1.442695
      %v677 = vpow.pop %v676
      %v678 = vmul.f32 %v660, 1.442695
      %v679 = vpow.pop %v678
      %v680 = vmul.f32 %v661, 1.442695
      %v681 = vpow.pop %v680
      %v682 = vmul.f32 %v662, 1.442695
      %v683 = vpow.pop %v682
      %v684 = vmul.f32 %v663, 1.442695
      %v685 = vpow.pop %v684
      %v686 = vmul.f32 %v664, 1.442695
      %v687 = vpow.pop %v686
      %v688 = vmul.f32 %v665, 1.442695
      %v689 = vpow.pop %v688
      %v690 = vmul.f32 %v666, 1.442695
      %v691 = vpow.pop %v690
      %v692 = vmul.f32 %v667, 1.442695
      %v693 = vpow.pop %v692
      %v694 = vmul.f32 %v668, 1.442695
      %v695 = vpow.pop %v694
      %v696 = vmul.f32 %v669, 1.442695
      %v697 = vpow.pop %v696
      %v698 = vmul.f32 %v670, 1.442695
      %v699 = vpow.pop %v698
      %v700 = vmul.f32 %v671, 1.442695
      %v701 = vpow.pop %v700
      %v702 = vmul.f32 %v672, 1.442695
      %v703 = vpow.pop %v702
      %v704 = vmul.f32 %v673, 1.442695
      %v705 = vpow.pop %v704
      %v706 = vadd.f32 %v675, 1.0
      %v707 = vadd.f32 %v677, 1.0
      %v708 = vadd.f32 %v679, 1.0
      %v709 = vadd.f32 %v681, 1.0
      %v710 = vadd.f32 %v683, 1.0
      %v711 = vadd.f32 %v685, 1.0
      %v712 = vadd.f32 %v687, 1.0
      %v713 = vadd.f32 %v689, 1.0
      %v714 = vadd.f32 %v691, 1.0
      %v715 = vadd.f32 %v693, 1.0
      %v716 = vadd.f32 %v695, 1.0
      %v717 = vadd.f32 %v697, 1.0
      %v718 = vadd.f32 %v699, 1.0
      %v719 = vadd.f32 %v701, 1.0
      %v720 = vadd.f32 %v703, 1.0
      %v721 = vadd.f32 %v705, 1.0
      %v722 = vrcp.pop %v706
      %v723 = vmul.f32 %v706, %v722
      %v724 = vsub.f32 1.0, %v723
      %v725 = vmul.f32 %v722, %v724
      %v726 = vadd.f32 %v722, %v725
      %vm727 = vweird.f32 %v706
      %vm728 = vweird.f32 %v722
      %vm729 = vmor %vm727, %vm728
      %v730 = vsel %vm729, %v722, %v726
      %v731 = vand.u32 2147483647, %v706
      %vm732 = vcmp.eq.f32.partialorder %v731, 8.507059e+37
      %v733 = vand.u32 %v706, 2147483648
      %v734 = vor.u32 1.1754944e-38, %v733
      %v735 = vsel %vm732, %v734, %v730
      %v736 = vmul.f32 1.0, %v735
      %v737 = vrcp.pop %v707
      %v738 = vmul.f32 %v707, %v737
      %v739 = vsub.f32 1.0, %v738
      %v740 = vmul.f32 %v737, %v739
      %v741 = vadd.f32 %v737, %v740
      %vm742 = vweird.f32 %v707
      %vm743 = vweird.f32 %v737
      %vm744 = vmor %vm742, %vm743
      %v745 = vsel %vm744, %v737, %v741
      %v746 = vand.u32 2147483647, %v707
      %vm747 = vcmp.eq.f32.partialorder %v746, 8.507059e+37
      %v748 = vand.u32 %v707, 2147483648
      %v749 = vor.u32 1.1754944e-38, %v748
      %v750 = vsel %vm747, %v749, %v745
      %v751 = vmul.f32 1.0, %v750
      %v752 = vrcp.pop %v708
      %v753 = vmul.f32 %v708, %v752
      %v754 = vsub.f32 1.0, %v753
      %v755 = vmul.f32 %v752, %v754
      %v756 = vadd.f32 %v752, %v755
      %vm757 = vweird.f32 %v708
      %vm758 = vweird.f32 %v752
      %vm759 = vmor %vm757, %vm758
      %v760 = vsel %vm759, %v752, %v756
      %v761 = vand.u32 2147483647, %v708
      %vm762 = vcmp.eq.f32.partialorder %v761, 8.507059e+37
      %v763 = vand.u32 %v708, 2147483648
      %v764 = vor.u32 1.1754944e-38, %v763
      %v765 = vsel %vm762, %v764, %v760
      %v766 = vmul.f32 1.0, %v765
      %v767 = vrcp.pop %v709
      %v768 = vmul.f32 %v709, %v767
      %v769 = vsub.f32 1.0, %v768
      %v770 = vmul.f32 %v767, %v769
      %v771 = vadd.f32 %v767, %v770
      %vm772 = vweird.f32 %v709
      %vm773 = vweird.f32 %v767
      %vm774 = vmor %vm772, %vm773
      %v775 = vsel %vm774, %v767, %v771
      %v776 = vand.u32 2147483647, %v709
      %vm777 = vcmp.eq.f32.partialorder %v776, 8.507059e+37
      %v778 = vand.u32 %v709, 2147483648
      %v779 = vor.u32 1.1754944e-38, %v778
      %v780 = vsel %vm777, %v779, %v775
      %v781 = vmul.f32 1.0, %v780
      %v782 = vrcp.pop %v710
      %v783 = vmul.f32 %v710, %v782
      %v784 = vsub.f32 1.0, %v783
      %v785 = vmul.f32 %v782, %v784
      %v786 = vadd.f32 %v782, %v785
      %vm787 = vweird.f32 %v710
      %vm788 = vweird.f32 %v782
      %vm789 = vmor %vm787, %vm788
      %v790 = vsel %vm789, %v782, %v786
      %v791 = vand.u32 2147483647, %v710
      %vm792 = vcmp.eq.f32.partialorder %v791, 8.507059e+37
      %v793 = vand.u32 %v710, 2147483648
      %v794 = vor.u32 1.1754944e-38, %v793
      %v795 = vsel %vm792, %v794, %v790
      %v796 = vmul.f32 1.0, %v795
      %v797 = vrcp.pop %v711
      %v798 = vmul.f32 %v711, %v797
      %v799 = vsub.f32 1.0, %v798
      %v800 = vmul.f32 %v797, %v799
      %v801 = vadd.f32 %v797, %v800
      %vm802 = vweird.f32 %v711
      %vm803 = vweird.f32 %v797
      %vm804 = vmor %vm802, %vm803
      %v805 = vsel %vm804, %v797, %v801
      %v806 = vand.u32 2147483647, %v711
      %vm807 = vcmp.eq.f32.partialorder %v806, 8.507059e+37
      %v808 = vand.u32 %v711, 2147483648
      %v809 = vor.u32 1.1754944e-38, %v808
      %v810 = vsel %vm807, %v809, %v805
      %v811 = vmul.f32 1.0, %v810
      %v812 = vrcp.pop %v712
      %v813 = vmul.f32 %v712, %v812
      %v814 = vsub.f32 1.0, %v813
      %v815 = vmul.f32 %v812, %v814
      %v816 = vadd.f32 %v812, %v815
      %vm817 = vweird.f32 %v712
      %vm818 = vweird.f32 %v812
      %vm819 = vmor %vm817, %vm818
      %v820 = vsel %vm819, %v812, %v816
      %v821 = vand.u32 2147483647, %v712
      %vm822 = vcmp.eq.f32.partialorder %v821, 8.507059e+37
      %v823 = vand.u32 %v712, 2147483648
      %v824 = vor.u32 1.1754944e-38, %v823
      %v825 = vsel %vm822, %v824, %v820
      %v826 = vmul.f32 1.0, %v825
      %v827 = vrcp.pop %v713
      %v828 = vmul.f32 %v713, %v827
      %v829 = vsub.f32 1.0, %v828
      %v830 = vmul.f32 %v827, %v829
      %v831 = vadd.f32 %v827, %v830
      %vm832 = vweird.f32 %v713
      %vm833 = vweird.f32 %v827
      %vm834 = vmor %vm832, %vm833
      %v835 = vsel %vm834, %v827, %v831
      %v836 = vand.u32 2147483647, %v713
      %vm837 = vcmp.eq.f32.partialorder %v836, 8.507059e+37
      %v838 = vand.u32 %v713, 2147483648
      %v839 = vor.u32 1.1754944e-38, %v838
      %v840 = vsel %vm837, %v839, %v835
      %v841 = vmul.f32 1.0, %v840
      %v842 = vrcp.pop %v714
      %v843 = vmul.f32 %v714, %v842
      %v844 = vsub.f32 1.0, %v843
      %v845 = vmul.f32 %v842, %v844
      %v846 = vadd.f32 %v842, %v845
      %vm847 = vweird.f32 %v714
      %vm848 = vweird.f32 %v842
      %vm849 = vmor %vm847, %vm848
      %v850 = vsel %vm849, %v842, %v846
      %v851 = vand.u32 2147483647, %v714
      %vm852 = vcmp.eq.f32.partialorder %v851, 8.507059e+37
      %v853 = vand.u32 %v714, 2147483648
      %v854 = vor.u32 1.1754944e-38, %v853
      %v855 = vsel %vm852, %v854, %v850
      %v856 = vmul.f32 1.0, %v855
      %v857 = vrcp.pop %v715
      %v858 = vmul.f32 %v715, %v857
      %v859 = vsub.f32 1.0, %v858
      %v860 = vmul.f32 %v857, %v859
      %v861 = vadd.f32 %v857, %v860
      %vm862 = vweird.f32 %v715
      %vm863 = vweird.f32 %v857
      %vm864 = vmor %vm862, %vm863
      %v865 = vsel %vm864, %v857, %v861
      %v866 = vand.u32 2147483647, %v715
      %vm867 = vcmp.eq.f32.partialorder %v866, 8.507059e+37
      %v868 = vand.u32 %v715, 2147483648
      %v869 = vor.u32 1.1754944e-38, %v868
      %v870 = vsel %vm867, %v869, %v865
      %v871 = vmul.f32 1.0, %v870
      %v872 = vrcp.pop %v716
      %v873 = vmul.f32 %v716, %v872
      %v874 = vsub.f32 1.0, %v873
      %v875 = vmul.f32 %v872, %v874
      %v876 = vadd.f32 %v872, %v875
      %vm877 = vweird.f32 %v716
      %vm878 = vweird.f32 %v872
      %vm879 = vmor %vm877, %vm878
      %v880 = vsel %vm879, %v872, %v876
      %v881 = vand.u32 2147483647, %v716
      %vm882 = vcmp.eq.f32.partialorder %v881, 8.507059e+37
      %v883 = vand.u32 %v716, 2147483648
      %v884 = vor.u32 1.1754944e-38, %v883
      %v885 = vsel %vm882, %v884, %v880
      %v886 = vmul.f32 1.0, %v885
      %v887 = vrcp.pop %v717
      %v888 = vmul.f32 %v717, %v887
      %v889 = vsub.f32 1.0, %v888
      %v890 = vmul.f32 %v887, %v889
      %v891 = vadd.f32 %v887, %v890
      %vm892 = vweird.f32 %v717
      %vm893 = vweird.f32 %v887
      %vm894 = vmor %vm892, %vm893
      %v895 = vsel %vm894, %v887, %v891
      %v896 = vand.u32 2147483647, %v717
      %vm897 = vcmp.eq.f32.partialorder %v896, 8.507059e+37
      %v898 = vand.u32 %v717, 2147483648
      %v899 = vor.u32 1.1754944e-38, %v898
      %v900 = vsel %vm897, %v899, %v895
      %v901 = vmul.f32 1.0, %v900
      %v902 = vrcp.pop %v718
      %v903 = vmul.f32 %v718, %v902
      %v904 = vsub.f32 1.0, %v903
      %v905 = vmul.f32 %v902, %v904
      %v906 = vadd.f32 %v902, %v905
      %vm907 = vweird.f32 %v718
      %vm908 = vweird.f32 %v902
      %vm909 = vmor %vm907, %vm908
      %v910 = vsel %vm909, %v902, %v906
      %v911 = vand.u32 2147483647, %v718
      %vm912 = vcmp.eq.f32.partialorder %v911, 8.507059e+37
      %v913 = vand.u32 %v718, 2147483648
      %v914 = vor.u32 1.1754944e-38, %v913
      %v915 = vsel %vm912, %v914, %v910
      %v916 = vmul.f32 1.0, %v915
      %v917 = vrcp.pop %v719
      %v918 = vmul.f32 %v719, %v917
      %v919 = vsub.f32 1.0, %v918
      %v920 = vmul.f32 %v917, %v919
      %v921 = vadd.f32 %v917, %v920
      %vm922 = vweird.f32 %v719
      %vm923 = vweird.f32 %v917
      %vm924 = vmor %vm922, %vm923
      %v925 = vsel %vm924, %v917, %v921
      %v926 = vand.u32 2147483647, %v719
      %vm927 = vcmp.eq.f32.partialorder %v926, 8.507059e+37
      %v928 = vand.u32 %v719, 2147483648
      %v929 = vor.u32 1.1754944e-38, %v928
      %v930 = vsel %vm927, %v929, %v925
      %v931 = vmul.f32 1.0, %v930
      %v932 = vrcp.pop %v720
      %v933 = vmul.f32 %v720, %v932
      %v934 = vsub.f32 1.0, %v933
      %v935 = vmul.f32 %v932, %v934
      %v936 = vadd.f32 %v932, %v935
      %vm937 = vweird.f32 %v720
      %vm938 = vweird.f32 %v932
      %vm939 = vmor %vm937, %vm938
      %v940 = vsel %vm939, %v932, %v936
      %v941 = vand.u32 2147483647, %v720
      %vm942 = vcmp.eq.f32.partialorder %v941, 8.507059e+37
      %v943 = vand.u32 %v720, 2147483648
      %v944 = vor.u32 1.1754944e-38, %v943
      %v945 = vsel %vm942, %v944, %v940
      %v946 = vmul.f32 1.0, %v945
      %v947 = vrcp.pop %v721
      %v948 = vmul.f32 %v721, %v947
      %v949 = vsub.f32 1.0, %v948
      %v950 = vmul.f32 %v947, %v949
      %v951 = vadd.f32 %v947, %v950
      %vm952 = vweird.f32 %v721
      %vm953 = vweird.f32 %v947
      %vm954 = vmor %vm952, %vm953
      %v955 = vsel %vm954, %v947, %v951
      %v956 = vand.u32 2147483647, %v721
      %vm957 = vcmp.eq.f32.partialorder %v956, 8.507059e+37
      %v958 = vand.u32 %v721, 2147483648
      %v959 = vor.u32 1.1754944e-38, %v958
      %v960 = vsel %vm957, %v959, %v955
      %v961 = vmul.f32 1.0, %v960
      %v962 = vsel %vm657, %v736, 0.0
      %v963 = vsel %vm657, %v751, 0.0
      %v964 = vsel %vm657, %v766, 0.0
      %v965 = vsel %vm657, %v781, 0.0
      %v966 = vsel %vm657, %v796, 0.0
      %v967 = vsel %vm657, %v811, 0.0
      %v968 = vsel %vm657, %v826, 0.0
      %v969 = vsel %vm657, %v841, 0.0
      %v970 = vsel %vm657, %v856, 0.0
      %v971 = vsel %vm657, %v871, 0.0
      %v972 = vsel %vm657, %v886, 0.0
      %v973 = vsel %vm657, %v901, 0.0
      %v974 = vsel %vm657, %v916, 0.0
      %v975 = vsel %vm657, %v931, 0.0
      %v976 = vsel %vm657, %v946, 0.0
      %v977 = vsel %vm657, %v961, 0.0
      %978 = vst [vmem:[%s194] sm:$0xff] %v962
      %979 = vst [vmem:[%s194 + $0x8] sm:$0xff] %v963
      %980 = vst [vmem:[%s194 + $0x10] sm:$0xff] %v964
      %981 = vst [vmem:[%s194 + $0x18] sm:$0xff] %v965
      %982 = vst [vmem:[%s194 + $0x20] sm:$0xff] %v966
      %983 = vst [vmem:[%s194 + $0x28] sm:$0xff] %v967
      %984 = vst [vmem:[%s194 + $0x30] sm:$0xff] %v968
      %985 = vst [vmem:[%s194 + $0x38] sm:$0xff] %v969
      %986 = vst [vmem:[%s194 + $0x40] sm:$0xff] %v970
      %987 = vst [vmem:[%s194 + $0x48] sm:$0xff] %v971
      %988 = vst [vmem:[%s194 + $0x50] sm:$0xff] %v972
      %989 = vst [vmem:[%s194 + $0x58] sm:$0xff] %v973
      %990 = vst [vmem:[%s194 + $0x60] sm:$0xff] %v974
      %991 = vst [vmem:[%s194 + $0x68] sm:$0xff] %v975
      %992 = vst [vmem:[%s194 + $0x70] sm:$0xff] %v976
      %993 = vst [vmem:[%s194 + $0x78] sm:$0xff] %v977
      %s994 = smul.u32 16, %s14
      %p995 = scmp.lt.s32.totalorder %s994, 31
      %s996 = scalar_select %p995, %s994, 31
      %s997 = smul.addr %s996, 8
      %s998 = scalar_lea.vmem %s3, %s997
      // Predicated region
      $region33: #{_lambda_.1} parent=31 // pred_check
        %p999 = pneg %p105
      $region34: #{_lambda_.1} parent=31 // pred_check_branch
        %1001 = sbr.rel (%p999) target = $region36
      $region35: #{_lambda_.1} parent=31 // pred_region
        %s1002 = smul.u32 16, %s14
      $region36: #{_lambda_.1} parent=31 // pred_fallthru
        _
    $region32: #{_lambda_.1} parent=5 // pred_fallthru
      _
    %p1003 = scmp.le.s32.totalorder 2, %s9
    // Predicated region
    $region37: #{_lambda_.1} parent=5 // pred_check
      %p1004 = pneg %p1003
    $region38: #{_lambda_.1} parent=5 // pred_check_branch
      %1006 = sbr.rel (%p1004) target = $region40
    $region39: #{_lambda_.1} parent=5 // pred_region
      %s1007 = ssub.s32 %s9, 2
      // Predicated region
      $region41: #{_lambda_.1} parent=39 // pred_check
        %p1008 = pneg %p111
      $region42: #{_lambda_.1} parent=39 // pred_check_branch
        %1010 = sbr.rel (%p1008) target = $region44
      $region43: #{_lambda_.1} parent=39 // pred_region
        %s1011 = smul.u32 16, %s15
        %p1012 = scmp.lt.s32.totalorder %s1011, 31
        %s1013 = scalar_select %p1012, %s1011, 31
        %s1014 = smul.addr %s1013, 8
        %s1015 = scalar_lea.vmem %s3, %s1014
      $region44: #{_lambda_.1} parent=39 // pred_fallthru
        _
    $region40: #{_lambda_.1} parent=5 // pred_fallthru
      _
  $region6: #{_lambda_.1} parent=0 // loop_footer
    %s13 = sadd.s32 1, %s9
  $region7: #{_lambda_.1} parent=0 // loop_footer_branch
    %8 = sbr.rel target = $region3
  $region8: #{_lambda_.1} parent=0 // loop_exit
    _

</llo_original>
